<compile_context>
chip_gen: v7x
topology: tpu7x:2x2x1
jax: 0.10.0
libtpu: 0.0.40
codegen_flags: <defaults>
</compile_context>

<pallas_src>
import functools

import jax
import jax.numpy as jnp
from jax.experimental import pallas as pl
from jax.experimental.pallas import tpu as pltpu


def _cdiv(a, b):
    return (a + b - 1) // b


def _round_up(n, m):
    return ((n + m - 1) // m) * m


K_PAD = 8  # input features (2) padded with zeros to a sublane-aligned contracting dim


def _mlp_kernel(xT_ref, w1_ref, b1_ref, w2_ref, b2_ref,
                w3_ref, b3_ref, w4_ref, b4_ref, o_ref):
    # Layer 1: Linear(2 -> 256) + ReLU on the MXU (bf16 in, f32 accumulate).
    # K is padded 2 -> 8 with zero columns; MXU cost scales with M x N tiles,
    # not K, so this is effectively free and removes the old VALU outer product.
    h1 = jnp.dot(w1_ref[...], xT_ref[...].astype(jnp.bfloat16),
                 preferred_element_type=jnp.float32) + b1_ref[...]
    h1 = jnp.maximum(h1, 0.0)                          # (256, TILE_B) f32

    # Layer 2: Linear(256 -> 128) + ReLU on the MXU.
    h2 = jnp.dot(w2_ref[...], h1.astype(jnp.bfloat16),
                 preferred_element_type=jnp.float32) + b2_ref[...]
    h2 = jnp.maximum(h2, 0.0)                          # (128, TILE_B) f32

    # Layer 3: Linear(128 -> 64) + ReLU on the MXU.
    h3 = jnp.dot(w3_ref[...], h2.astype(jnp.bfloat16),
                 preferred_element_type=jnp.float32) + b3_ref[...]
    h3 = jnp.maximum(h3, 0.0)                          # (64, TILE_B) f32

    # Layer 4: Linear(64 -> 1) + Sigmoid.  A single-output matmul wastes the
    # MXU; VPU multiply + sublane (XLU) reduction instead.
    h4 = jnp.sum(h3 * w4_ref[...], axis=0, keepdims=True) + b4_ref[...]  # (1, TILE_B)

    # Sigmoid via EUP exp + approx reciprocal (both off the VALU critical slot).
    e = jnp.exp(-h4)
    o_ref[...] = pl.reciprocal(1.0 + e, approx=True)   # lane-dense store


def _choose_tile(B, tile_b):
    """Lane-aligned batch tile: multiple of 128, <= 8192, >= 2 steps when possible."""
    tile_b = max(128, min(int(tile_b), 8192))
    tile_b = _round_up(tile_b, 128)
    tile_b = min(tile_b, _round_up(max(B, 1), 128))
    if B > 128:
        # Guarantee at least two grid steps so the "parallel" axis can shard
        # across both TensorCores on v7x.
        tile_b = min(tile_b, _round_up(_cdiv(B, 2), 128))
    return tile_b


@functools.partial(jax.jit, static_argnames=("tile_b",))
def discriminator_forward(x, params, *, tile_b=4096):
    """x: (B, 2) float32.  Returns sigmoid probabilities of shape (B, 1)."""
    B = x.shape[0]
    tile_b = _choose_tile(B, tile_b)
    B_pad = _round_up(B, tile_b)

    # Zero-pad batch (rows dropped on the final slice) and the feature dim
    # (zero columns in w1 make the padded features inert).
    x = jnp.pad(x.astype(jnp.float32),
                ((0, B_pad - B), (0, K_PAD - x.shape[1])))
    xT = x.T                                            # (K_PAD, B_pad), batch on lanes

    w1 = jnp.pad(params["w1"].astype(jnp.float32),
                 ((0, 0), (0, K_PAD - params["w1"].shape[1]))
                 ).astype(jnp.bfloat16)                 # (256, 8)  -> MXU bf16
    b1 = params["b1"].astype(jnp.float32)               # (256, 1)
    w2 = params["w2"].astype(jnp.bfloat16)              # (128, 256) -> MXU bf16
    b2 = params["b2"].astype(jnp.float32)               # (128, 1)
    w3 = params["w3"].astype(jnp.bfloat16)              # (64, 128)  -> MXU bf16
    b3 = params["b3"].astype(jnp.float32)               # (64, 1)
    w4 = params["w4"].astype(jnp.float32)               # (64, 1)
    b4 = params["b4"].astype(jnp.float32)               # (1, 1)

    num_tiles = B_pad // tile_b
    const = lambda a: pl.BlockSpec(a.shape, lambda i: (0,) * a.ndim)

    flops = 2 * B_pad * (K_PAD * 256 + 256 * 128 + 128 * 64 + 64)
    weight_bytes = sum(int(a.size) * a.dtype.itemsize
                       for a in (w1, b1, w2, b2, w3, b3, w4, b4))
    bytes_accessed = int(xT.size) * 4 + B_pad * 4 + weight_bytes

    out = pl.pallas_call(
        _mlp_kernel,
        out_shape=jax.ShapeDtypeStruct((1, B_pad), jnp.float32),
        grid=(num_tiles,),
        in_specs=[
            pl.BlockSpec((K_PAD, tile_b), lambda i: (0, i)),   # x tile (pipelined)
            const(w1), const(b1), const(w2), const(b2),
            const(w3), const(b3), const(w4), const(b4),
        ],
        out_specs=pl.BlockSpec((1, tile_b), lambda i: (0, i)),
        compiler_params=pltpu.CompilerParams(
            dimension_semantics=("parallel",),          # megacore on v7x
            vmem_limit_bytes=32 * 1024 * 1024,          # fits all gens (v7x: 64 MiB phys)
        ),
        cost_estimate=pl.CostEstimate(
            flops=flops, transcendentals=B_pad, bytes_accessed=bytes_accessed),
    )(xT, w1, b1, w2, b2, w3, b3, w4, b4)

    return out[0, :B][:, None]                          # (B, 1)


def init_params(key):
    """Deterministic synthetic parameters.

    PyTorch nn.Linear stores weight as (out, in); we keep that layout for
    layers 1-3 (they are the LHS of kernel matmuls) and store layer 4's
    weight transposed as (64, 1) plus column-vector biases (out, 1).
    """
    layers = [(2, 256), (256, 128), (128, 64), (64, 1)]
    params = {}
    for i, (fan_in, fan_out) in enumerate(layers, start=1):
        key, kw, kb = jax.random.split(key, 3)
        bound = 1.0 / jnp.sqrt(fan_in)
        if i < 4:
            params[f"w{i}"] = jax.random.uniform(
                kw, (fan_out, fan_in), jnp.float32, -bound, bound)
        else:
            params[f"w{i}"] = jax.random.uniform(
                kw, (fan_in, fan_out), jnp.float32, -bound, bound)  # (64, 1)
        params[f"b{i}"] = jax.random.uniform(
            kb, (fan_out, 1), jnp.float32, -bound, bound)
    return params


def _reference_forward(x, p):
    h = jnp.maximum(x @ p["w1"].T + p["b1"].T, 0.0)
    h = jnp.maximum(h @ p["w2"].T + p["b2"].T, 0.0)
    h = jnp.maximum(h @ p["w3"].T + p["b3"].T, 0.0)
    return jax.nn.sigmoid(h @ p["w4"] + p["b4"].T)


if __name__ == "__main__":
    key = jax.random.PRNGKey(0)
    key, kx, kx2 = jax.random.split(key, 3)
    params = init_params(key)

    # Small batch (pads up to one 128-wide tile, single grid step).
    B = 8
    x = jax.random.normal(kx, (B, 2), jnp.float32)
    out = jax.block_until_ready(discriminator_forward(x, params))
    ref = _reference_forward(x, params)
    assert out.shape == (B, 1)
    # bf16 MXU matmuls introduce ~1e-2-level drift vs the f32 reference.
    assert jnp.allclose(out, ref, atol=2e-2, rtol=2e-2), "mismatch vs reference (B=8)"

    # Ragged, multi-tile path (forces >= 2 grid steps of 128 with padding).
    B2 = 200
    x2 = jax.random.normal(kx2, (B2, 2), jnp.float32)
    out2 = jax.block_until_ready(discriminator_forward(x2, params))
    ref2 = _reference_forward(x2, params)
    assert out2.shape == (B2, 1)
    assert jnp.allclose(out2, ref2, atol=2e-2, rtol=2e-2), "mismatch vs reference (B=200)"

    print("KERNEL_OK")
</pallas_src>

<mosaic_0001>
module attributes {stable_mosaic.version = 11 : i64} {
  func.func @_mlp_kernel(%arg0: i32, %arg1: memref<8x128xf32, #tpu.memory_space<vmem>>, %arg2: memref<256x8xbf16, #tpu.memory_space<vmem>>, %arg3: memref<256x1xf32, #tpu.memory_space<vmem>>, %arg4: memref<128x256xbf16, #tpu.memory_space<vmem>>, %arg5: memref<128x1xf32, #tpu.memory_space<vmem>>, %arg6: memref<64x128xbf16, #tpu.memory_space<vmem>>, %arg7: memref<64x1xf32, #tpu.memory_space<vmem>>, %arg8: memref<64x1xf32, #tpu.memory_space<vmem>>, %arg9: memref<1x1xf32, #tpu.memory_space<vmem>>, %arg10: memref<1x128xf32, #tpu.memory_space<vmem>>) attributes {dimension_semantics = [#tpu.dimension_semantics<parallel>], iteration_bounds = array<i64: 1>, scalar_prefetch = 0 : i64, scratch_operands = 0 : i64, tpu.core_type = #tpu.core_type<tc>, window_params = [{transform_indices = @transform_0, window_bounds = array<i64: 8, 128>}, {pipeline_mode = #tpu.pipeline_mode<synchronous>, transform_indices = @transform_1, window_bounds = array<i64: 256, 8>}, {pipeline_mode = #tpu.pipeline_mode<synchronous>, transform_indices = @transform_2, window_bounds = array<i64: 256, 1>}, {pipeline_mode = #tpu.pipeline_mode<synchronous>, transform_indices = @transform_3, window_bounds = array<i64: 128, 256>}, {pipeline_mode = #tpu.pipeline_mode<synchronous>, transform_indices = @transform_4, window_bounds = array<i64: 128, 1>}, {pipeline_mode = #tpu.pipeline_mode<synchronous>, transform_indices = @transform_5, window_bounds = array<i64: 64, 128>}, {pipeline_mode = #tpu.pipeline_mode<synchronous>, transform_indices = @transform_6, window_bounds = array<i64: 64, 1>}, {pipeline_mode = #tpu.pipeline_mode<synchronous>, transform_indices = @transform_7, window_bounds = array<i64: 64, 1>}, {pipeline_mode = #tpu.pipeline_mode<synchronous>, transform_indices = @transform_8, window_bounds = array<i64: 1, 1>}, {transform_indices = @transform_9, window_bounds = array<i64: 1, 128>}]} {
    %c0 = arith.constant 0 : index
    %c0_0 = arith.constant 0 : index
    %0 = vector.load %arg2[%c0, %c0_0] : memref<256x8xbf16, #tpu.memory_space<vmem>>, vector<256x8xbf16>
    %c0_1 = arith.constant 0 : index
    %c0_2 = arith.constant 0 : index
    %1 = vector.load %arg1[%c0_1, %c0_2] : memref<8x128xf32, #tpu.memory_space<vmem>>, vector<8x128xf32>
    %2 = arith.truncf %1 : vector<8x128xf32> to vector<8x128xbf16>
    %cst = arith.constant dense<0.000000e+00> : vector<256x128xf32>
    %3 = tpu.matmul %0, %2, %cst {dimension_numbers = #tpu.dot_dimension_numbers<[1], [0], [0], [1], [0, 0, 1, 1], [], []>} : vector<256x8xbf16>, vector<8x128xbf16>, vector<256x128xf32> -> vector<256x128xf32>
    %c0_3 = arith.constant 0 : index
    %c0_4 = arith.constant 0 : index
    %4 = vector.load %arg3[%c0_3, %c0_4] : memref<256x1xf32, #tpu.memory_space<vmem>>, vector<256x1xf32>
    %5 = vector.broadcast %4 : vector<256x1xf32> to vector<256x128xf32>
    %6 = arith.addf %3, %5 : vector<256x128xf32>
    %cst_5 = arith.constant 0.000000e+00 : f32
    %7 = vector.broadcast %cst_5 : f32 to vector<256x128xf32>
    %8 = arith.maximumf %6, %7 : vector<256x128xf32>
    %c0_6 = arith.constant 0 : index
    %c0_7 = arith.constant 0 : index
    %9 = vector.load %arg4[%c0_6, %c0_7] : memref<128x256xbf16, #tpu.memory_space<vmem>>, vector<128x256xbf16>
    %10 = arith.truncf %8 : vector<256x128xf32> to vector<256x128xbf16>
    %cst_8 = arith.constant dense<0.000000e+00> : vector<128x128xf32>
    %11 = tpu.matmul %9, %10, %cst_8 {dimension_numbers = #tpu.dot_dimension_numbers<[1], [0], [0], [1], [0, 0, 1, 1], [], []>} : vector<128x256xbf16>, vector<256x128xbf16>, vector<128x128xf32> -> vector<128x128xf32>
    %c0_9 = arith.constant 0 : index
    %c0_10 = arith.constant 0 : index
    %12 = vector.load %arg5[%c0_9, %c0_10] : memref<128x1xf32, #tpu.memory_space<vmem>>, vector<128x1xf32>
    %13 = vector.broadcast %12 : vector<128x1xf32> to vector<128x128xf32>
    %14 = arith.addf %11, %13 : vector<128x128xf32>
    %cst_11 = arith.constant 0.000000e+00 : f32
    %15 = vector.broadcast %cst_11 : f32 to vector<128x128xf32>
    %16 = arith.maximumf %14, %15 : vector<128x128xf32>
    %c0_12 = arith.constant 0 : index
    %c0_13 = arith.constant 0 : index
    %17 = vector.load %arg6[%c0_12, %c0_13] : memref<64x128xbf16, #tpu.memory_space<vmem>>, vector<64x128xbf16>
    %18 = arith.truncf %16 : vector<128x128xf32> to vector<128x128xbf16>
    %cst_14 = arith.constant dense<0.000000e+00> : vector<64x128xf32>
    %19 = tpu.matmul %17, %18, %cst_14 {dimension_numbers = #tpu.dot_dimension_numbers<[1], [0], [0], [1], [0, 0, 1, 1], [], []>} : vector<64x128xbf16>, vector<128x128xbf16>, vector<64x128xf32> -> vector<64x128xf32>
    %c0_15 = arith.constant 0 : index
    %c0_16 = arith.constant 0 : index
    %20 = vector.load %arg7[%c0_15, %c0_16] : memref<64x1xf32, #tpu.memory_space<vmem>>, vector<64x1xf32>
    %21 = vector.broadcast %20 : vector<64x1xf32> to vector<64x128xf32>
    %22 = arith.addf %19, %21 : vector<64x128xf32>
    %cst_17 = arith.constant 0.000000e+00 : f32
    %23 = vector.broadcast %cst_17 : f32 to vector<64x128xf32>
    %24 = arith.maximumf %22, %23 : vector<64x128xf32>
    %c0_18 = arith.constant 0 : index
    %c0_19 = arith.constant 0 : index
    %25 = vector.load %arg8[%c0_18, %c0_19] : memref<64x1xf32, #tpu.memory_space<vmem>>, vector<64x1xf32>
    %26 = vector.broadcast %25 : vector<64x1xf32> to vector<64x128xf32>
    %27 = arith.mulf %24, %26 : vector<64x128xf32>
    %cst_20 = arith.constant dense<0.000000e+00> : vector<128xf32>
    %28 = vector.multi_reduction <add>, %27, %cst_20 [0] : vector<64x128xf32> to vector<128xf32>
    %29 = vector.shape_cast %28 : vector<128xf32> to vector<1x128xf32>
    %c0_21 = arith.constant 0 : index
    %c0_22 = arith.constant 0 : index
    %30 = vector.load %arg9[%c0_21, %c0_22] : memref<1x1xf32, #tpu.memory_space<vmem>>, vector<1x1xf32>
    %31 = vector.broadcast %30 : vector<1x1xf32> to vector<1x128xf32>
    %32 = arith.addf %29, %31 : vector<1x128xf32>
    %cst_23 = arith.constant 0.000000e+00 : f32
    %33 = vector.broadcast %cst_23 : f32 to vector<1x128xf32>
    %34 = arith.subf %33, %32 : vector<1x128xf32>
    %35 = math.exp %34 : vector<1x128xf32>
    %cst_24 = arith.constant 1.000000e+00 : f32
    %36 = vector.broadcast %cst_24 : f32 to vector<1x128xf32>
    %37 = arith.addf %36, %35 : vector<1x128xf32>
    %38 = tpu.reciprocal %37 {approx = true} : vector<1x128xf32> -> vector<1x128xf32>
    %c0_25 = arith.constant 0 : index
    %c0_26 = arith.constant 0 : index
    %39 = vector.load %arg10[%c0_25, %c0_26] : memref<1x128xf32, #tpu.memory_space<vmem>>, vector<1x128xf32>
    tpu.vector_store %arg10[%c0_25, %c0_26], %38 {strides = array<i32>} : memref<1x128xf32, #tpu.memory_space<vmem>>, vector<1x128xf32>,
    return
  }
  func.func @transform_0(%arg0: i32) -> (i32, i32) {
    %c0_i32 = arith.constant 0 : i32
    %c0_i32_0 = arith.constant 0 : i32
    return %c0_i32, %arg0 : i32, i32
  }
  func.func @transform_1(%arg0: i32) -> (i32, i32) {
    %c0_i32 = arith.constant 0 : i32
    %c0_i32_0 = arith.constant 0 : i32
    %c0_i32_1 = arith.constant 0 : i32
    return %c0_i32, %c0_i32_0 : i32, i32
  }
  func.func @transform_2(%arg0: i32) -> (i32, i32) {
    %c0_i32 = arith.constant 0 : i32
    %c0_i32_0 = arith.constant 0 : i32
    %c0_i32_1 = arith.constant 0 : i32
    return %c0_i32, %c0_i32_0 : i32, i32
  }
  func.func @transform_3(%arg0: i32) -> (i32, i32) {
    %c0_i32 = arith.constant 0 : i32
    %c0_i32_0 = arith.constant 0 : i32
    %c0_i32_1 = arith.constant 0 : i32
    return %c0_i32, %c0_i32_0 : i32, i32
  }
  func.func @transform_4(%arg0: i32) -> (i32, i32) {
    %c0_i32 = arith.constant 0 : i32
    %c0_i32_0 = arith.constant 0 : i32
    %c0_i32_1 = arith.constant 0 : i32
    return %c0_i32, %c0_i32_0 : i32, i32
  }
  func.func @transform_5(%arg0: i32) -> (i32, i32) {
    %c0_i32 = arith.constant 0 : i32
    %c0_i32_0 = arith.constant 0 : i32
    %c0_i32_1 = arith.constant 0 : i32
    return %c0_i32, %c0_i32_0 : i32, i32
  }
  func.func @transform_6(%arg0: i32) -> (i32, i32) {
    %c0_i32 = arith.constant 0 : i32
    %c0_i32_0 = arith.constant 0 : i32
    %c0_i32_1 = arith.constant 0 : i32
    return %c0_i32, %c0_i32_0 : i32, i32
  }
  func.func @transform_7(%arg0: i32) -> (i32, i32) {
    %c0_i32 = arith.constant 0 : i32
    %c0_i32_0 = arith.constant 0 : i32
    %c0_i32_1 = arith.constant 0 : i32
    return %c0_i32, %c0_i32_0 : i32, i32
  }
  func.func @transform_8(%arg0: i32) -> (i32, i32) {
    %c0_i32 = arith.constant 0 : i32
    %c0_i32_0 = arith.constant 0 : i32
    %c0_i32_1 = arith.constant 0 : i32
    return %c0_i32, %c0_i32_0 : i32, i32
  }
  func.func @transform_9(%arg0: i32) -> (i32, i32) {
    %c0_i32 = arith.constant 0 : i32
    %c0_i32_0 = arith.constant 0 : i32
    return %c0_i32, %arg0 : i32, i32
  }
}

</mosaic_0001>

<llo_original>
// kernel: discriminator_forward.1
$region0: #{discriminator_forward.1}
  #allocation0 [shape = 'u32[]', space=smem, size = 0x4, offset = 0x4, fixed_abs, tag = 'smem constant byte address 0x4 - core index']
  #allocation1 [shape = 'u32[144,128]{1,0:T(1,128)}', space=vmem, size = 0x12000, scoped, tag = 'internal scratch']
  #allocation2 [shape = 'f32[1,1]{1,0:T(1,128)S(1)}', space=vmem, size = 0x200, scoped, tag = 'scoped memory for discriminator_forward.1']
  %s0 = inlined_call_operand.vmem [shape: f32[8,128], index: 0, kind: input, shape index: {}]
  %s1 = inlined_call_operand.vmem [shape: bf16[256,8], index: 1, kind: input, shape index: {}]
  %s2 = inlined_call_operand.vmem [shape: f32[256,1], index: 2, kind: input, shape index: {}]
  %s3 = inlined_call_operand.vmem [shape: bf16[128,256], index: 3, kind: input, shape index: {}]
  %s4 = inlined_call_operand.vmem [shape: f32[128,1], index: 4, kind: input, shape index: {}]
  %s5 = inlined_call_operand.vmem [shape: bf16[64,128], index: 5, kind: input, shape index: {}]
  %s6 = inlined_call_operand.vmem [shape: f32[64,1], index: 6, kind: input, shape index: {}]
  %s7 = inlined_call_operand.vmem [shape: f32[64,1], index: 7, kind: input, shape index: {}]
  %s8 = inlined_call_operand.<no memory space> [shape: f32[1,1], index: 8, kind: input, shape index: {}]
  %s9 = inlined_call_operand.vmem [shape: f32[1,128], index: 9, kind: output, shape index: {}]
  %s10 = sld [smem:[#allocation0]]
  $region46: #{discriminator_forward.1} parent=0
    _
  %s12 = ssub.s32 1, %s10
  %s13 = scalar_select 0, %s12, %s10
  %v14 = vstv %s8
  %15 = vst [vmem:[#allocation2] sm:$0x1] %v14
  // Predicated region
  $region2: #{discriminator_forward.1} parent=0 // pred_check
    _
  $region3: #{discriminator_forward.1} parent=0 // pred_check_branch
    %17 = sbr.rel (0) target = $region5
  $region4: #{discriminator_forward.1} parent=0 // pred_region
    _
  $region5: #{discriminator_forward.1} parent=0 // pred_fallthru
    _
  // Predicated region
  $region6: #{discriminator_forward.1} parent=0 // pred_check
    _
  $region7: #{discriminator_forward.1} parent=0 // pred_check_branch
    %19 = sbr.rel (0) target = $region9
  $region8: #{discriminator_forward.1} parent=0 // pred_region
    _
  $region9: #{discriminator_forward.1} parent=0 // pred_fallthru
    _
  // Predicated region
  $region10: #{discriminator_forward.1} parent=0 // pred_check
    _
  $region11: #{discriminator_forward.1} parent=0 // pred_check_branch
    %21 = sbr.rel (0) target = $region13
  $region12: #{discriminator_forward.1} parent=0 // pred_region
    _
  $region13: #{discriminator_forward.1} parent=0 // pred_fallthru
    _
  // Predicated region
  $region14: #{discriminator_forward.1} parent=0 // pred_check
    _
  $region15: #{discriminator_forward.1} parent=0 // pred_check_branch
    %23 = sbr.rel (0) target = $region17
  $region16: #{discriminator_forward.1} parent=0 // pred_region
    _
  $region17: #{discriminator_forward.1} parent=0 // pred_fallthru
    _
  // Predicated region
  $region18: #{discriminator_forward.1} parent=0 // pred_check
    _
  $region19: #{discriminator_forward.1} parent=0 // pred_check_branch
    %25 = sbr.rel (0) target = $region21
  $region20: #{discriminator_forward.1} parent=0 // pred_region
    _
  $region21: #{discriminator_forward.1} parent=0 // pred_fallthru
    _
  // Predicated region
  $region22: #{discriminator_forward.1} parent=0 // pred_check
    _
  $region23: #{discriminator_forward.1} parent=0 // pred_check_branch
    %27 = sbr.rel (0) target = $region25
  $region24: #{discriminator_forward.1} parent=0 // pred_region
    _
  $region25: #{discriminator_forward.1} parent=0 // pred_fallthru
    _
  // Predicated region
  $region26: #{discriminator_forward.1} parent=0 // pred_check
    _
  $region27: #{discriminator_forward.1} parent=0 // pred_check_branch
    %29 = sbr.rel (0) target = $region29
  $region28: #{discriminator_forward.1} parent=0 // pred_region
    _
  $region29: #{discriminator_forward.1} parent=0 // pred_fallthru
    _
  // Predicated region
  $region30: #{discriminator_forward.1} parent=0 // pred_check
    _
  $region31: #{discriminator_forward.1} parent=0 // pred_check_branch
    %31 = sbr.rel (0) target = $region33
  $region32: #{discriminator_forward.1} parent=0 // pred_region
    _
  $region33: #{discriminator_forward.1} parent=0 // pred_fallthru
    _
  // Predicated region
  $region34: #{discriminator_forward.1} parent=0 // pred_check
    _
  $region35: #{discriminator_forward.1} parent=0 // pred_check_branch
    %33 = sbr.rel (0) target = $region37
  $region36: #{discriminator_forward.1} parent=0 // pred_region
    _
  $region37: #{discriminator_forward.1} parent=0 // pred_fallthru
    _
  %v35 = vld [vmem:[%s1] sm:$0xf]
  %v36 = vld [vmem:[%s1 + $0x4] sm:$0xf]
  %v37 = vld [vmem:[%s1 + $0x8] sm:$0xf]
  %v38 = vld [vmem:[%s1 + $0xc] sm:$0xf]
  %v39 = vld [vmem:[%s1 + $0x10] sm:$0xf]
  %v40 = vld [vmem:[%s1 + $0x14] sm:$0xf]
  %v41 = vld [vmem:[%s1 + $0x18] sm:$0xf]
  %v42 = vld [vmem:[%s1 + $0x1c] sm:$0xf]
  %v43 = vld [vmem:[%s1 + $0x20] sm:$0xf]
  %v44 = vld [vmem:[%s1 + $0x24] sm:$0xf]
  %v45 = vld [vmem:[%s1 + $0x28] sm:$0xf]
  %v46 = vld [vmem:[%s1 + $0x2c] sm:$0xf]
  %v47 = vld [vmem:[%s1 + $0x30] sm:$0xf]
  %v48 = vld [vmem:[%s1 + $0x34] sm:$0xf]
  %v49 = vld [vmem:[%s1 + $0x38] sm:$0xf]
  %v50 = vld [vmem:[%s1 + $0x3c] sm:$0xf]
  %v51 = vld [vmem:[%s1 + $0x40] sm:$0xf]
  %v52 = vld [vmem:[%s1 + $0x44] sm:$0xf]
  %v53 = vld [vmem:[%s1 + $0x48] sm:$0xf]
  %v54 = vld [vmem:[%s1 + $0x4c] sm:$0xf]
  %v55 = vld [vmem:[%s1 + $0x50] sm:$0xf]
  %v56 = vld [vmem:[%s1 + $0x54] sm:$0xf]
  %v57 = vld [vmem:[%s1 + $0x58] sm:$0xf]
  %v58 = vld [vmem:[%s1 + $0x5c] sm:$0xf]
  %v59 = vld [vmem:[%s1 + $0x60] sm:$0xf]
  %v60 = vld [vmem:[%s1 + $0x64] sm:$0xf]
  %v61 = vld [vmem:[%s1 + $0x68] sm:$0xf]
  %v62 = vld [vmem:[%s1 + $0x6c] sm:$0xf]
  %v63 = vld [vmem:[%s1 + $0x70] sm:$0xf]
  %v64 = vld [vmem:[%s1 + $0x74] sm:$0xf]
  %v65 = vld [vmem:[%s1 + $0x78] sm:$0xf]
  %v66 = vld [vmem:[%s1 + $0x7c] sm:$0xf]
  %v67 = vld [vmem:[%s0] sm:$0xff]
  %v68 = vpack.c.bf16 %v67, %v67
  %v69 = vld [vmem:[%s2] sm:$0xff]
  %v70 = vld [vmem:[%s2 + $0x8] sm:$0xff]
  %v71 = vld [vmem:[%s2 + $0x10] sm:$0xff]
  %v72 = vld [vmem:[%s2 + $0x18] sm:$0xff]
  %v73 = vld [vmem:[%s2 + $0x20] sm:$0xff]
  %v74 = vld [vmem:[%s2 + $0x28] sm:$0xff]
  %v75 = vld [vmem:[%s2 + $0x30] sm:$0xff]
  %v76 = vld [vmem:[%s2 + $0x38] sm:$0xff]
  %v77 = vld [vmem:[%s2 + $0x40] sm:$0xff]
  %v78 = vld [vmem:[%s2 + $0x48] sm:$0xff]
  %v79 = vld [vmem:[%s2 + $0x50] sm:$0xff]
  %v80 = vld [vmem:[%s2 + $0x58] sm:$0xff]
  %v81 = vld [vmem:[%s2 + $0x60] sm:$0xff]
  %v82 = vld [vmem:[%s2 + $0x68] sm:$0xff]
  %v83 = vld [vmem:[%s2 + $0x70] sm:$0xff]
  %v84 = vld [vmem:[%s2 + $0x78] sm:$0xff]
  %v85 = vld [vmem:[%s2 + $0x80] sm:$0xff]
  %v86 = vld [vmem:[%s2 + $0x88] sm:$0xff]
  %v87 = vld [vmem:[%s2 + $0x90] sm:$0xff]
  %v88 = vld [vmem:[%s2 + $0x98] sm:$0xff]
  %v89 = vld [vmem:[%s2 + $0xa0] sm:$0xff]
  %v90 = vld [vmem:[%s2 + $0xa8] sm:$0xff]
  %v91 = vld [vmem:[%s2 + $0xb0] sm:$0xff]
  %v92 = vld [vmem:[%s2 + $0xb8] sm:$0xff]
  %v93 = vld [vmem:[%s2 + $0xc0] sm:$0xff]
  %v94 = vld [vmem:[%s2 + $0xc8] sm:$0xff]
  %v95 = vld [vmem:[%s2 + $0xd0] sm:$0xff]
  %v96 = vld [vmem:[%s2 + $0xd8] sm:$0xff]
  %v97 = vld [vmem:[%s2 + $0xe0] sm:$0xff]
  %v98 = vld [vmem:[%s2 + $0xe8] sm:$0xff]
  %v99 = vld [vmem:[%s2 + $0xf0] sm:$0xff]
  %v100 = vld [vmem:[%s2 + $0xf8] sm:$0xff]
  %102 = vset.pattern.permute.xlu0 0
  %103 = vperm.xlu0 %102, %v69
  %v104 = vpop.permute.xlu0 %103
  %107 = vset.pattern.permute.xlu0 0
  %108 = vperm.xlu0 %107, %v70
  %v109 = vpop.permute.xlu0 %108
  %112 = vset.pattern.permute.xlu0 0
  %113 = vperm.xlu0 %112, %v71
  %v114 = vpop.permute.xlu0 %113
  %117 = vset.pattern.permute.xlu0 0
  %118 = vperm.xlu0 %117, %v72
  %v119 = vpop.permute.xlu0 %118
  %122 = vset.pattern.permute.xlu0 0
  %123 = vperm.xlu0 %122, %v73
  %v124 = vpop.permute.xlu0 %123
  %127 = vset.pattern.permute.xlu0 0
  %128 = vperm.xlu0 %127, %v74
  %v129 = vpop.permute.xlu0 %128
  %132 = vset.pattern.permute.xlu0 0
  %133 = vperm.xlu0 %132, %v75
  %v134 = vpop.permute.xlu0 %133
  %137 = vset.pattern.permute.xlu0 0
  %138 = vperm.xlu0 %137, %v76
  %v139 = vpop.permute.xlu0 %138
  %142 = vset.pattern.permute.xlu0 0
  %143 = vperm.xlu0 %142, %v77
  %v144 = vpop.permute.xlu0 %143
  %147 = vset.pattern.permute.xlu0 0
  %148 = vperm.xlu0 %147, %v78
  %v149 = vpop.permute.xlu0 %148
  %152 = vset.pattern.permute.xlu0 0
  %153 = vperm.xlu0 %152, %v79
  %v154 = vpop.permute.xlu0 %153
  %157 = vset.pattern.permute.xlu0 0
  %158 = vperm.xlu0 %157, %v80
  %v159 = vpop.permute.xlu0 %158
  %162 = vset.pattern.permute.xlu0 0
  %163 = vperm.xlu0 %162, %v81
  %v164 = vpop.permute.xlu0 %163
  %167 = vset.pattern.permute.xlu0 0
  %168 = vperm.xlu0 %167, %v82
  %v169 = vpop.permute.xlu0 %168
  %172 = vset.pattern.permute.xlu0 0
  %173 = vperm.xlu0 %172, %v83
  %v174 = vpop.permute.xlu0 %173
  %177 = vset.pattern.permute.xlu0 0
  %178 = vperm.xlu0 %177, %v84
  %v179 = vpop.permute.xlu0 %178
  %182 = vset.pattern.permute.xlu0 0
  %183 = vperm.xlu0 %182, %v85
  %v184 = vpop.permute.xlu0 %183
  %187 = vset.pattern.permute.xlu0 0
  %188 = vperm.xlu0 %187, %v86
  %v189 = vpop.permute.xlu0 %188
  %192 = vset.pattern.permute.xlu0 0
  %193 = vperm.xlu0 %192, %v87
  %v194 = vpop.permute.xlu0 %193
  %197 = vset.pattern.permute.xlu0 0
  %198 = vperm.xlu0 %197, %v88
  %v199 = vpop.permute.xlu0 %198
  %202 = vset.pattern.permute.xlu0 0
  %203 = vperm.xlu0 %202, %v89
  %v204 = vpop.permute.xlu0 %203
  %207 = vset.pattern.permute.xlu0 0
  %208 = vperm.xlu0 %207, %v90
  %v209 = vpop.permute.xlu0 %208
  %212 = vset.pattern.permute.xlu0 0
  %213 = vperm.xlu0 %212, %v91
  %v214 = vpop.permute.xlu0 %213
  %217 = vset.pattern.permute.xlu0 0
  %218 = vperm.xlu0 %217, %v92
  %v219 = vpop.permute.xlu0 %218
  %222 = vset.pattern.permute.xlu0 0
  %223 = vperm.xlu0 %222, %v93
  %v224 = vpop.permute.xlu0 %223
  %227 = vset.pattern.permute.xlu0 0
  %228 = vperm.xlu0 %227, %v94
  %v229 = vpop.permute.xlu0 %228
  %232 = vset.pattern.permute.xlu0 0
  %233 = vperm.xlu0 %232, %v95
  %v234 = vpop.permute.xlu0 %233
  %237 = vset.pattern.permute.xlu0 0
  %238 = vperm.xlu0 %237, %v96
  %v239 = vpop.permute.xlu0 %238
  %242 = vset.pattern.permute.xlu0 0
  %243 = vperm.xlu0 %242, %v97
  %v244 = vpop.permute.xlu0 %243
  %247 = vset.pattern.permute.xlu0 0
  %248 = vperm.xlu0 %247, %v98
  %v249 = vpop.permute.xlu0 %248
  %252 = vset.pattern.permute.xlu0 0
  %253 = vperm.xlu0 %252, %v99
  %v254 = vpop.permute.xlu0 %253
  %257 = vset.pattern.permute.xlu0 0
  %258 = vperm.xlu0 %257, %v100
  %v259 = vpop.permute.xlu0 %258
  %v293 = vunpack.c.l.b16 %v35
  %v294 = vunpack.c.l.b16 %v36
  %v295 = vunpack.c.l.b16 %v37
  %v296 = vunpack.c.l.b16 %v38
  %v297 = vunpack.c.l.b16 %v39
  %v298 = vunpack.c.l.b16 %v40
  %v299 = vunpack.c.l.b16 %v41
  %v300 = vunpack.c.l.b16 %v42
  %v301 = vunpack.c.l.b16 %v43
  %v302 = vunpack.c.l.b16 %v44
  %v303 = vunpack.c.l.b16 %v45
  %v304 = vunpack.c.l.b16 %v46
  %v305 = vunpack.c.l.b16 %v47
  %v306 = vunpack.c.l.b16 %v48
  %v307 = vunpack.c.l.b16 %v49
  %v308 = vunpack.c.l.b16 %v50
  %v309 = vunpack.c.l.b16 %v51
  %v310 = vunpack.c.l.b16 %v52
  %v311 = vunpack.c.l.b16 %v53
  %v312 = vunpack.c.l.b16 %v54
  %v313 = vunpack.c.l.b16 %v55
  %v314 = vunpack.c.l.b16 %v56
  %v315 = vunpack.c.l.b16 %v57
  %v316 = vunpack.c.l.b16 %v58
  %v317 = vunpack.c.l.b16 %v59
  %v318 = vunpack.c.l.b16 %v60
  %v319 = vunpack.c.l.b16 %v61
  %v320 = vunpack.c.l.b16 %v62
  %v321 = vunpack.c.l.b16 %v63
  %v322 = vunpack.c.l.b16 %v64
  %v323 = vunpack.c.l.b16 %v65
  %v324 = vunpack.c.l.b16 %v66
  %v325 = vpack.c.b16 %v294, %v293
  %v326 = vpack.c.b16 %v296, %v295
  %v327 = vpack.c.b16 %v298, %v297
  %v328 = vpack.c.b16 %v300, %v299
  %v329 = vpack.c.b16 %v302, %v301
  %v330 = vpack.c.b16 %v304, %v303
  %v331 = vpack.c.b16 %v306, %v305
  %v332 = vpack.c.b16 %v308, %v307
  %v333 = vpack.c.b16 %v310, %v309
  %v334 = vpack.c.b16 %v312, %v311
  %v335 = vpack.c.b16 %v314, %v313
  %v336 = vpack.c.b16 %v316, %v315
  %v337 = vpack.c.b16 %v318, %v317
  %v338 = vpack.c.b16 %v320, %v319
  %v339 = vpack.c.b16 %v322, %v321
  %v340 = vpack.c.b16 %v324, %v323
  %vm341 = vcmask 64512
  %v343 = vsel %vm341, %v325, 0
  %v346 = vsel %vm341, %v326, 0
  %v349 = vsel %vm341, %v327, 0
  %v352 = vsel %vm341, %v328, 0
  %v355 = vsel %vm341, %v329, 0
  %v358 = vsel %vm341, %v330, 0
  %v361 = vsel %vm341, %v331, 0
  %v364 = vsel %vm341, %v332, 0
  %v367 = vsel %vm341, %v333, 0
  %v370 = vsel %vm341, %v334, 0
  %v373 = vsel %vm341, %v335, 0
  %v376 = vsel %vm341, %v336, 0
  %v379 = vsel %vm341, %v337, 0
  %v382 = vsel %vm341, %v338, 0
  %v385 = vsel %vm341, %v339, 0
  %v388 = vsel %vm341, %v340, 0
  %vm390 = vcmask 1043456
  %v392 = vsel %vm390, %v68, 0
  %394 = vmatprep.subr.bf16.mxu0 0
  %395 = vmatpush1.bf16.msra.mxu0 %v392
  %396 = vmatprep.subr.bf16.mxu0 0
  %397 = vmatpush1.bf16.msra.mxu0 0
  %398 = vmatprep.subr.bf16.mxu0 0
  %399 = vmatpush1.bf16.msra.mxu0 0
  %400 = vmatprep.subr.bf16.mxu0 0
  %401 = vmatpush1.bf16.msra.mxu0 0
  %402 = vmatprep.subr.bf16.mxu0 0
  %403 = vmatpush1.bf16.msra.mxu0 0
  %404 = vmatprep.subr.bf16.mxu0 0
  %405 = vmatpush1.bf16.msra.mxu0 0
  %406 = vmatprep.subr.bf16.mxu0 0
  %407 = vmatpush1.bf16.msra.mxu0 0
  %408 = vmatprep.subr.bf16.mxu0 0
  %409 = vmatpush1.bf16.msra.mxu0 0
  %410 = vmatprep.subr.bf16.mxu0 0
  %411 = vmatpush1.bf16.msra.mxu0 0
  %412 = vmatprep.subr.bf16.mxu0 0
  %413 = vmatpush1.bf16.msra.mxu0 0
  %414 = vmatprep.subr.bf16.mxu0 0
  %415 = vmatpush1.bf16.msra.mxu0 0
  %416 = vmatprep.subr.bf16.mxu0 0
  %417 = vmatpush1.bf16.msra.mxu0 0
  %418 = vmatprep.subr.bf16.mxu0 0
  %419 = vmatpush1.bf16.msra.mxu0 0
  %420 = vmatprep.subr.bf16.mxu0 0
  %421 = vmatpush1.bf16.msra.mxu0 0
  %422 = vmatprep.subr.bf16.mxu0 0
  %423 = vmatpush1.bf16.msra.mxu0 0
  %424 = vmatprep.subr.bf16.mxu0 0
  %425 = vmatpush1.bf16.msra.mxu0 0
  %426 = vmatprep.mubr.bf16.mxu0 0
  %427 = vmatmul.mubr.bf16.gmra.mrb[0].mxu0 %v343
  %v428 = vpop.f32.mrb[0].mxu0
  %v429 = vadd.f32 %v104, %v428
  %v430 = vpop.f32.mrb[0].mxu0
  %v431 = vpop.f32.mrb[0].mxu0
  %v432 = vadd.f32 %v109, %v431
  %v433 = vpop.f32.mrb[0].mxu0
  %434 = vmatprep.mubr.bf16.mxu0 0
  %435 = vmatmul.mubr.bf16.gmra.mrb[0].mxu0 %v346
  %v436 = vpop.f32.mrb[0].mxu0
  %v437 = vadd.f32 %v114, %v436
  %v438 = vpop.f32.mrb[0].mxu0
  %v439 = vpop.f32.mrb[0].mxu0
  %v440 = vadd.f32 %v119, %v439
  %v441 = vpop.f32.mrb[0].mxu0
  %442 = vmatprep.mubr.bf16.mxu0 0
  %443 = vmatmul.mubr.bf16.gmra.mrb[0].mxu0 %v349
  %v444 = vpop.f32.mrb[0].mxu0
  %v445 = vadd.f32 %v124, %v444
  %v446 = vpop.f32.mrb[0].mxu0
  %v447 = vpop.f32.mrb[0].mxu0
  %v448 = vadd.f32 %v129, %v447
  %v449 = vpop.f32.mrb[0].mxu0
  %450 = vmatprep.mubr.bf16.mxu0 0
  %451 = vmatmul.mubr.bf16.gmra.mrb[0].mxu0 %v352
  %v452 = vpop.f32.mrb[0].mxu0
  %v453 = vadd.f32 %v134, %v452
  %v454 = vpop.f32.mrb[0].mxu0
  %v455 = vpop.f32.mrb[0].mxu0
  %v456 = vadd.f32 %v139, %v455
  %v457 = vpop.f32.mrb[0].mxu0
  %458 = vmatprep.mubr.bf16.mxu0 0
  %459 = vmatmul.mubr.bf16.gmra.mrb[0].mxu0 %v355
  %v460 = vpop.f32.mrb[0].mxu0
  %v461 = vadd.f32 %v144, %v460
  %v462 = vpop.f32.mrb[0].mxu0
  %v463 = vpop.f32.mrb[0].mxu0
  %v464 = vadd.f32 %v149, %v463
  %v465 = vpop.f32.mrb[0].mxu0
  %466 = vmatprep.mubr.bf16.mxu0 0
  %467 = vmatmul.mubr.bf16.gmra.mrb[0].mxu0 %v358
  %v468 = vpop.f32.mrb[0].mxu0
  %v469 = vadd.f32 %v154, %v468
  %v470 = vpop.f32.mrb[0].mxu0
  %v471 = vpop.f32.mrb[0].mxu0
  %v472 = vadd.f32 %v159, %v471
  %v473 = vpop.f32.mrb[0].mxu0
  %474 = vmatprep.mubr.bf16.mxu0 0
  %475 = vmatmul.mubr.bf16.gmra.mrb[0].mxu0 %v361
  %v476 = vpop.f32.mrb[0].mxu0
  %v477 = vadd.f32 %v164, %v476
  %v478 = vpop.f32.mrb[0].mxu0
  %v479 = vpop.f32.mrb[0].mxu0
  %v480 = vadd.f32 %v169, %v479
  %v481 = vpop.f32.mrb[0].mxu0
  %482 = vmatprep.mubr.bf16.mxu0 0
  %483 = vmatmul.mubr.bf16.gmra.mrb[0].mxu0 %v364
  %v484 = vpop.f32.mrb[0].mxu0
  %v485 = vadd.f32 %v174, %v484
  %v486 = vpop.f32.mrb[0].mxu0
  %v487 = vpop.f32.mrb[0].mxu0
  %v488 = vadd.f32 %v179, %v487
  %v489 = vpop.f32.mrb[0].mxu0
  %490 = vmatprep.mubr.bf16.mxu0 0
  %491 = vmatmul.mubr.bf16.gmra.mrb[0].mxu0 %v367
  %v492 = vpop.f32.mrb[0].mxu0
  %v493 = vadd.f32 %v184, %v492
  %v494 = vpop.f32.mrb[0].mxu0
  %v495 = vpop.f32.mrb[0].mxu0
  %v496 = vadd.f32 %v189, %v495
  %v497 = vpop.f32.mrb[0].mxu0
  %498 = vmatprep.mubr.bf16.mxu0 0
  %499 = vmatmul.mubr.bf16.gmra.mrb[0].mxu0 %v370
  %v500 = vpop.f32.mrb[0].mxu0
  %v501 = vadd.f32 %v194, %v500
  %v502 = vpop.f32.mrb[0].mxu0
  %v503 = vpop.f32.mrb[0].mxu0
  %v504 = vadd.f32 %v199, %v503
  %v505 = vpop.f32.mrb[0].mxu0
  %506 = vmatprep.mubr.bf16.mxu0 0
  %507 = vmatmul.mubr.bf16.gmra.mrb[0].mxu0 %v373
  %v508 = vpop.f32.mrb[0].mxu0
  %v509 = vadd.f32 %v204, %v508
  %v510 = vpop.f32.mrb[0].mxu0
  %v511 = vpop.f32.mrb[0].mxu0
  %v512 = vadd.f32 %v209, %v511
  %v513 = vpop.f32.mrb[0].mxu0
  %514 = vmatprep.mubr.bf16.mxu0 0
  %515 = vmatmul.mubr.bf16.gmra.mrb[0].mxu0 %v376
  %v516 = vpop.f32.mrb[0].mxu0
  %v517 = vadd.f32 %v214, %v516
  %v518 = vpop.f32.mrb[0].mxu0
  %v519 = vpop.f32.mrb[0].mxu0
  %v520 = vadd.f32 %v219, %v519
  %v521 = vpop.f32.mrb[0].mxu0
  %522 = vmatprep.mubr.bf16.mxu0 0
  %523 = vmatmul.mubr.bf16.gmra.mrb[0].mxu0 %v379
  %v524 = vpop.f32.mrb[0].mxu0
  %v525 = vadd.f32 %v224, %v524
  %v526 = vpop.f32.mrb[0].mxu0
  %v527 = vpop.f32.mrb[0].mxu0
  %v528 = vadd.f32 %v229, %v527
  %v529 = vpop.f32.mrb[0].mxu0
  %530 = vmatprep.mubr.bf16.mxu0 0
  %531 = vmatmul.mubr.bf16.gmra.mrb[0].mxu0 %v382
  %v532 = vpop.f32.mrb[0].mxu0
  %v533 = vadd.f32 %v234, %v532
  %v534 = vpop.f32.mrb[0].mxu0
  %v535 = vpop.f32.mrb[0].mxu0
  %v536 = vadd.f32 %v239, %v535
  %v537 = vpop.f32.mrb[0].mxu0
  %538 = vmatprep.mubr.bf16.mxu0 0
  %539 = vmatmul.mubr.bf16.gmra.mrb[0].mxu0 %v385
  %v540 = vpop.f32.mrb[0].mxu0
  %v541 = vadd.f32 %v244, %v540
  %v542 = vpop.f32.mrb[0].mxu0
  %v543 = vpop.f32.mrb[0].mxu0
  %v544 = vadd.f32 %v249, %v543
  %v545 = vpop.f32.mrb[0].mxu0
  %546 = vmatprep.mubr.bf16.mxu0 0
  %547 = vmatmul.mubr.bf16.gmra.mrb[0].mxu0 %v388
  %v548 = vpop.f32.mrb[0].mxu0
  %v549 = vadd.f32 %v254, %v548
  %v550 = vpop.f32.mrb[0].mxu0
  %v551 = vpop.f32.mrb[0].mxu0
  %v552 = vadd.f32 %v259, %v551
  %v553 = vpop.f32.mrb[0].mxu0
  %554 = vdwg.mxu0
  %v555 = vmax.f32 %v429, 0.0
  %v556 = vmax.f32 %v432, 0.0
  %v557 = vmax.f32 %v437, 0.0
  %v558 = vmax.f32 %v440, 0.0
  %v559 = vmax.f32 %v445, 0.0
  %v560 = vmax.f32 %v448, 0.0
  %v561 = vmax.f32 %v453, 0.0
  %v562 = vmax.f32 %v456, 0.0
  %v563 = vmax.f32 %v461, 0.0
  %v564 = vmax.f32 %v464, 0.0
  %v565 = vmax.f32 %v469, 0.0
  %v566 = vmax.f32 %v472, 0.0
  %v567 = vmax.f32 %v477, 0.0
  %v568 = vmax.f32 %v480, 0.0
  %v569 = vmax.f32 %v485, 0.0
  %v570 = vmax.f32 %v488, 0.0
  %v571 = vmax.f32 %v493, 0.0
  %v572 = vmax.f32 %v496, 0.0
  %v573 = vmax.f32 %v501, 0.0
  %v574 = vmax.f32 %v504, 0.0
  %v575 = vmax.f32 %v509, 0.0
  %v576 = vmax.f32 %v512, 0.0
  %v577 = vmax.f32 %v517, 0.0
  %v578 = vmax.f32 %v520, 0.0
  %v579 = vmax.f32 %v525, 0.0
  %v580 = vmax.f32 %v528, 0.0
  %v581 = vmax.f32 %v533, 0.0
  %v582 = vmax.f32 %v536, 0.0
  %v583 = vmax.f32 %v541, 0.0
  %v584 = vmax.f32 %v544, 0.0
  %v585 = vmax.f32 %v549, 0.0
  %v586 = vmax.f32 %v552, 0.0
  %v587 = vld [vmem:[%s3] sm:$0xff]
  %v588 = vld [vmem:[%s3 + $0x8] sm:$0xff]
  %v589 = vld [vmem:[%s3 + $0x10] sm:$0xff]
  %v590 = vld [vmem:[%s3 + $0x18] sm:$0xff]
  %v591 = vld [vmem:[%s3 + $0x20] sm:$0xff]
  %v592 = vld [vmem:[%s3 + $0x28] sm:$0xff]
  %v593 = vld [vmem:[%s3 + $0x30] sm:$0xff]
  %v594 = vld [vmem:[%s3 + $0x38] sm:$0xff]
  %v595 = vld [vmem:[%s3 + $0x40] sm:$0xff]
  %v596 = vld [vmem:[%s3 + $0x48] sm:$0xff]
  %v597 = vld [vmem:[%s3 + $0x50] sm:$0xff]
  %v598 = vld [vmem:[%s3 + $0x58] sm:$0xff]
  %v599 = vld [vmem:[%s3 + $0x60] sm:$0xff]
  %v600 = vld [vmem:[%s3 + $0x68] sm:$0xff]
  %v601 = vld [vmem:[%s3 + $0x70] sm:$0xff]
  %v602 = vld [vmem:[%s3 + $0x78] sm:$0xff]
  %v603 = vpack.c.bf16 %v556, %v555
  %v604 = vpack.c.bf16 %v558, %v557
  %v605 = vpack.c.bf16 %v560, %v559
  %v606 = vpack.c.bf16 %v562, %v561
  %v607 = vpack.c.bf16 %v564, %v563
  %v608 = vpack.c.bf16 %v566, %v565
  %v609 = vpack.c.bf16 %v568, %v567
  %v610 = vpack.c.bf16 %v570, %v569
  %v611 = vpack.c.bf16 %v572, %v571
  %v612 = vpack.c.bf16 %v574, %v573
  %v613 = vpack.c.bf16 %v576, %v575
  %v614 = vpack.c.bf16 %v578, %v577
  %v615 = vpack.c.bf16 %v580, %v579
  %v616 = vpack.c.bf16 %v582, %v581
  %v617 = vpack.c.bf16 %v584, %v583
  %v618 = vpack.c.bf16 %v586, %v585
  %v619 = vld [vmem:[%s4] sm:$0xff]
  %v620 = vld [vmem:[%s4 + $0x8] sm:$0xff]
  %v621 = vld [vmem:[%s4 + $0x10] sm:$0xff]
  %v622 = vld [vmem:[%s4 + $0x18] sm:$0xff]
  %v623 = vld [vmem:[%s4 + $0x20] sm:$0xff]
  %v624 = vld [vmem:[%s4 + $0x28] sm:$0xff]
  %v625 = vld [vmem:[%s4 + $0x30] sm:$0xff]
  %v626 = vld [vmem:[%s4 + $0x38] sm:$0xff]
  %v627 = vld [vmem:[%s4 + $0x40] sm:$0xff]
  %v628 = vld [vmem:[%s4 + $0x48] sm:$0xff]
  %v629 = vld [vmem:[%s4 + $0x50] sm:$0xff]
  %v630 = vld [vmem:[%s4 + $0x58] sm:$0xff]
  %v631 = vld [vmem:[%s4 + $0x60] sm:$0xff]
  %v632 = vld [vmem:[%s4 + $0x68] sm:$0xff]
  %v633 = vld [vmem:[%s4 + $0x70] sm:$0xff]
  %v634 = vld [vmem:[%s4 + $0x78] sm:$0xff]
  %636 = vset.pattern.permute.xlu0 0
  %637 = vperm.xlu0 %636, %v619
  %v638 = vpop.permute.xlu0 %637
  %641 = vset.pattern.permute.xlu0 0
  %642 = vperm.xlu0 %641, %v620
  %v643 = vpop.permute.xlu0 %642
  %646 = vset.pattern.permute.xlu0 0
  %647 = vperm.xlu0 %646, %v621
  %v648 = vpop.permute.xlu0 %647
  %651 = vset.pattern.permute.xlu0 0
  %652 = vperm.xlu0 %651, %v622
  %v653 = vpop.permute.xlu0 %652
  %656 = vset.pattern.permute.xlu0 0
  %657 = vperm.xlu0 %656, %v623
  %v658 = vpop.permute.xlu0 %657
  %661 = vset.pattern.permute.xlu0 0
  %662 = vperm.xlu0 %661, %v624
  %v663 = vpop.permute.xlu0 %662
  %666 = vset.pattern.permute.xlu0 0
  %667 = vperm.xlu0 %666, %v625
  %v668 = vpop.permute.xlu0 %667
  %671 = vset.pattern.permute.xlu0 0
  %672 = vperm.xlu0 %671, %v626
  %v673 = vpop.permute.xlu0 %672
  %676 = vset.pattern.permute.xlu0 0
  %677 = vperm.xlu0 %676, %v627
  %v678 = vpop.permute.xlu0 %677
  %681 = vset.pattern.permute.xlu0 0
  %682 = vperm.xlu0 %681, %v628
  %v683 = vpop.permute.xlu0 %682
  %686 = vset.pattern.permute.xlu0 0
  %687 = vperm.xlu0 %686, %v629
  %v688 = vpop.permute.xlu0 %687
  %691 = vset.pattern.permute.xlu0 0
  %692 = vperm.xlu0 %691, %v630
  %v693 = vpop.permute.xlu0 %692
  %696 = vset.pattern.permute.xlu0 0
  %697 = vperm.xlu0 %696, %v631
  %v698 = vpop.permute.xlu0 %697
  %701 = vset.pattern.permute.xlu0 0
  %702 = vperm.xlu0 %701, %v632
  %v703 = vpop.permute.xlu0 %702
  %706 = vset.pattern.permute.xlu0 0
  %707 = vperm.xlu0 %706, %v633
  %v708 = vpop.permute.xlu0 %707
  %711 = vset.pattern.permute.xlu0 0
  %712 = vperm.xlu0 %711, %v634
  %v713 = vpop.permute.xlu0 %712
  %v731 = vunpack.c.l.b16 %v587
  %v732 = vunpack.c.h.b16 %v587
  %v733 = vunpack.c.l.b16 %v588
  %v734 = vunpack.c.h.b16 %v588
  %v735 = vunpack.c.l.b16 %v589
  %v736 = vunpack.c.h.b16 %v589
  %v737 = vunpack.c.l.b16 %v590
  %v738 = vunpack.c.h.b16 %v590
  %v739 = vunpack.c.l.b16 %v591
  %v740 = vunpack.c.h.b16 %v591
  %v741 = vunpack.c.l.b16 %v592
  %v742 = vunpack.c.h.b16 %v592
  %v743 = vunpack.c.l.b16 %v593
  %v744 = vunpack.c.h.b16 %v593
  %v745 = vunpack.c.l.b16 %v594
  %v746 = vunpack.c.h.b16 %v594
  %v747 = vunpack.c.l.b16 %v595
  %v748 = vunpack.c.h.b16 %v595
  %v749 = vunpack.c.l.b16 %v596
  %v750 = vunpack.c.h.b16 %v596
  %v751 = vunpack.c.l.b16 %v597
  %v752 = vunpack.c.h.b16 %v597
  %v753 = vunpack.c.l.b16 %v598
  %v754 = vunpack.c.h.b16 %v598
  %v755 = vunpack.c.l.b16 %v599
  %v756 = vunpack.c.h.b16 %v599
  %v757 = vunpack.c.l.b16 %v600
  %v758 = vunpack.c.h.b16 %v600
  %v759 = vunpack.c.l.b16 %v601
  %v760 = vunpack.c.h.b16 %v601
  %v761 = vunpack.c.l.b16 %v602
  %v762 = vunpack.c.h.b16 %v602
  %v763 = vpack.c.b16 %v733, %v731
  %v764 = vpack.c.b16 %v734, %v732
  %v765 = vpack.c.b16 %v737, %v735
  %v766 = vpack.c.b16 %v738, %v736
  %v767 = vpack.c.b16 %v741, %v739
  %v768 = vpack.c.b16 %v742, %v740
  %v769 = vpack.c.b16 %v745, %v743
  %v770 = vpack.c.b16 %v746, %v744
  %v771 = vpack.c.b16 %v749, %v747
  %v772 = vpack.c.b16 %v750, %v748
  %v773 = vpack.c.b16 %v753, %v751
  %v774 = vpack.c.b16 %v754, %v752
  %v775 = vpack.c.b16 %v757, %v755
  %v776 = vpack.c.b16 %v758, %v756
  %v777 = vpack.c.b16 %v761, %v759
  %v778 = vpack.c.b16 %v762, %v760
  %795 = vmatprep.subr.bf16.mxu0 0
  %796 = vmatpush1.bf16.msra.mxu0 %v603
  %797 = vmatprep.subr.bf16.mxu0 0
  %798 = vmatpush1.bf16.msra.mxu0 %v604
  %799 = vmatprep.subr.bf16.mxu0 0
  %800 = vmatpush1.bf16.msra.mxu0 %v605
  %801 = vmatprep.subr.bf16.mxu0 0
  %802 = vmatpush1.bf16.msra.mxu0 %v606
  %803 = vmatprep.subr.bf16.mxu0 0
  %804 = vmatpush1.bf16.msra.mxu0 %v607
  %805 = vmatprep.subr.bf16.mxu0 0
  %806 = vmatpush1.bf16.msra.mxu0 %v608
  %807 = vmatprep.subr.bf16.mxu0 0
  %808 = vmatpush1.bf16.msra.mxu0 %v609
  %809 = vmatprep.subr.bf16.mxu0 0
  %810 = vmatpush1.bf16.msra.mxu0 %v610
  %811 = vmatprep.subr.bf16.mxu0 0
  %812 = vmatpush1.bf16.msra.mxu0 %v611
  %813 = vmatprep.subr.bf16.mxu0 0
  %814 = vmatpush1.bf16.msra.mxu0 %v612
  %815 = vmatprep.subr.bf16.mxu0 0
  %816 = vmatpush1.bf16.msra.mxu0 %v613
  %817 = vmatprep.subr.bf16.mxu0 0
  %818 = vmatpush1.bf16.msra.mxu0 %v614
  %819 = vmatprep.subr.bf16.mxu0 0
  %820 = vmatpush1.bf16.msra.mxu0 %v615
  %821 = vmatprep.subr.bf16.mxu0 0
  %822 = vmatpush1.bf16.msra.mxu0 %v616
  %823 = vmatprep.subr.bf16.mxu0 0
  %824 = vmatpush1.bf16.msra.mxu0 %v617
  %825 = vmatprep.subr.bf16.mxu0 0
  %826 = vmatpush1.bf16.msra.mxu0 %v618
  %827 = vmatprep.mubr.bf16.mxu0 %v764
  %828 = vmatmul.mubr.bf16.gmra.mrb[0].mxu0 %v763
  %v829 = vpop.f32.mrb[0].mxu0
  %v830 = vadd.f32 %v638, %v829
  %v831 = vpop.f32.mrb[0].mxu0
  %v832 = vpop.f32.mrb[0].mxu0
  %v833 = vadd.f32 %v643, %v832
  %v834 = vpop.f32.mrb[0].mxu0
  %835 = vmatprep.mubr.bf16.mxu0 %v766
  %836 = vmatmul.mubr.bf16.gmra.mrb[0].mxu0 %v765
  %v837 = vpop.f32.mrb[0].mxu0
  %v838 = vadd.f32 %v648, %v837
  %v839 = vpop.f32.mrb[0].mxu0
  %v840 = vpop.f32.mrb[0].mxu0
  %v841 = vadd.f32 %v653, %v840
  %v842 = vpop.f32.mrb[0].mxu0
  %843 = vmatprep.mubr.bf16.mxu0 %v768
  %844 = vmatmul.mubr.bf16.gmra.mrb[0].mxu0 %v767
  %v845 = vpop.f32.mrb[0].mxu0
  %v846 = vadd.f32 %v658, %v845
  %v847 = vpop.f32.mrb[0].mxu0
  %v848 = vpop.f32.mrb[0].mxu0
  %v849 = vadd.f32 %v663, %v848
  %v850 = vpop.f32.mrb[0].mxu0
  %851 = vmatprep.mubr.bf16.mxu0 %v770
  %852 = vmatmul.mubr.bf16.gmra.mrb[0].mxu0 %v769
  %v853 = vpop.f32.mrb[0].mxu0
  %v854 = vadd.f32 %v668, %v853
  %v855 = vpop.f32.mrb[0].mxu0
  %v856 = vpop.f32.mrb[0].mxu0
  %v857 = vadd.f32 %v673, %v856
  %v858 = vpop.f32.mrb[0].mxu0
  %859 = vmatprep.mubr.bf16.mxu0 %v772
  %860 = vmatmul.mubr.bf16.gmra.mrb[0].mxu0 %v771
  %v861 = vpop.f32.mrb[0].mxu0
  %v862 = vadd.f32 %v678, %v861
  %v863 = vpop.f32.mrb[0].mxu0
  %v864 = vpop.f32.mrb[0].mxu0
  %v865 = vadd.f32 %v683, %v864
  %v866 = vpop.f32.mrb[0].mxu0
  %867 = vmatprep.mubr.bf16.mxu0 %v774
  %868 = vmatmul.mubr.bf16.gmra.mrb[0].mxu0 %v773
  %v869 = vpop.f32.mrb[0].mxu0
  %v870 = vadd.f32 %v688, %v869
  %v871 = vpop.f32.mrb[0].mxu0
  %v872 = vpop.f32.mrb[0].mxu0
  %v873 = vadd.f32 %v693, %v872
  %v874 = vpop.f32.mrb[0].mxu0
  %875 = vmatprep.mubr.bf16.mxu0 %v776
  %876 = vmatmul.mubr.bf16.gmra.mrb[0].mxu0 %v775
  %v877 = vpop.f32.mrb[0].mxu0
  %v878 = vadd.f32 %v698, %v877
  %v879 = vpop.f32.mrb[0].mxu0
  %v880 = vpop.f32.mrb[0].mxu0
  %v881 = vadd.f32 %v703, %v880
  %v882 = vpop.f32.mrb[0].mxu0
  %883 = vmatprep.mubr.bf16.mxu0 %v778
  %884 = vmatmul.mubr.bf16.gmra.mrb[0].mxu0 %v777
  %v885 = vpop.f32.mrb[0].mxu0
  %v886 = vadd.f32 %v708, %v885
  %v887 = vpop.f32.mrb[0].mxu0
  %v888 = vpop.f32.mrb[0].mxu0
  %v889 = vadd.f32 %v713, %v888
  %v890 = vpop.f32.mrb[0].mxu0
  %891 = vdwg.mxu0
  %v892 = vmax.f32 %v830, 0.0
  %v893 = vmax.f32 %v833, 0.0
  %v894 = vmax.f32 %v838, 0.0
  %v895 = vmax.f32 %v841, 0.0
  %v896 = vmax.f32 %v846, 0.0
  %v897 = vmax.f32 %v849, 0.0
  %v898 = vmax.f32 %v854, 0.0
  %v899 = vmax.f32 %v857, 0.0
  %v900 = vmax.f32 %v862, 0.0
  %v901 = vmax.f32 %v865, 0.0
  %v902 = vmax.f32 %v870, 0.0
  %v903 = vmax.f32 %v873, 0.0
  %v904 = vmax.f32 %v878, 0.0
  %v905 = vmax.f32 %v881, 0.0
  %v906 = vmax.f32 %v886, 0.0
  %v907 = vmax.f32 %v889, 0.0
  %v908 = vld [vmem:[%s5] sm:$0xf]
  %v909 = vld [vmem:[%s5 + $0x4] sm:$0xf]
  %v910 = vld [vmem:[%s5 + $0x8] sm:$0xf]
  %v911 = vld [vmem:[%s5 + $0xc] sm:$0xf]
  %v912 = vld [vmem:[%s5 + $0x10] sm:$0xf]
  %v913 = vld [vmem:[%s5 + $0x14] sm:$0xf]
  %v914 = vld [vmem:[%s5 + $0x18] sm:$0xf]
  %v915 = vld [vmem:[%s5 + $0x1c] sm:$0xf]
  %v916 = vpack.c.bf16 %v893, %v892
  %v917 = vpack.c.bf16 %v895, %v894
  %v918 = vpack.c.bf16 %v897, %v896
  %v919 = vpack.c.bf16 %v899, %v898
  %v920 = vpack.c.bf16 %v901, %v900
  %v921 = vpack.c.bf16 %v903, %v902
  %v922 = vpack.c.bf16 %v905, %v904
  %v923 = vpack.c.bf16 %v907, %v906
  %v924 = vld [vmem:[%s6] sm:$0xff]
  %v925 = vld [vmem:[%s6 + $0x8] sm:$0xff]
  %v926 = vld [vmem:[%s6 + $0x10] sm:$0xff]
  %v927 = vld [vmem:[%s6 + $0x18] sm:$0xff]
  %v928 = vld [vmem:[%s6 + $0x20] sm:$0xff]
  %v929 = vld [vmem:[%s6 + $0x28] sm:$0xff]
  %v930 = vld [vmem:[%s6 + $0x30] sm:$0xff]
  %v931 = vld [vmem:[%s6 + $0x38] sm:$0xff]
  %933 = vset.pattern.permute.xlu0 0
  %934 = vperm.xlu0 %933, %v924
  %v935 = vpop.permute.xlu0 %934
  %938 = vset.pattern.permute.xlu0 0
  %939 = vperm.xlu0 %938, %v925
  %v940 = vpop.permute.xlu0 %939
  %943 = vset.pattern.permute.xlu0 0
  %944 = vperm.xlu0 %943, %v926
  %v945 = vpop.permute.xlu0 %944
  %948 = vset.pattern.permute.xlu0 0
  %949 = vperm.xlu0 %948, %v927
  %v950 = vpop.permute.xlu0 %949
  %953 = vset.pattern.permute.xlu0 0
  %954 = vperm.xlu0 %953, %v928
  %v955 = vpop.permute.xlu0 %954
  %958 = vset.pattern.permute.xlu0 0
  %959 = vperm.xlu0 %958, %v929
  %v960 = vpop.permute.xlu0 %959
  %963 = vset.pattern.permute.xlu0 0
  %964 = vperm.xlu0 %963, %v930
  %v965 = vpop.permute.xlu0 %964
  %968 = vset.pattern.permute.xlu0 0
  %969 = vperm.xlu0 %968, %v931
  %v970 = vpop.permute.xlu0 %969
  %v980 = vunpack.c.l.b16 %v908
  %v981 = vunpack.c.l.b16 %v909
  %v982 = vunpack.c.l.b16 %v910
  %v983 = vunpack.c.l.b16 %v911
  %v984 = vunpack.c.l.b16 %v912
  %v985 = vunpack.c.l.b16 %v913
  %v986 = vunpack.c.l.b16 %v914
  %v987 = vunpack.c.l.b16 %v915
  %v988 = vpack.c.b16 %v981, %v980
  %v989 = vpack.c.b16 %v983, %v982
  %v990 = vpack.c.b16 %v985, %v984
  %v991 = vpack.c.b16 %v987, %v986
  %996 = vmatprep.subr.bf16.mxu0 0
  %997 = vmatpush1.bf16.msra.mxu0 %v916
  %998 = vmatprep.subr.bf16.mxu0 0
  %999 = vmatpush1.bf16.msra.mxu0 %v917
  %1000 = vmatprep.subr.bf16.mxu0 0
  %1001 = vmatpush1.bf16.msra.mxu0 %v918
  %1002 = vmatprep.subr.bf16.mxu0 0
  %1003 = vmatpush1.bf16.msra.mxu0 %v919
  %1004 = vmatprep.subr.bf16.mxu0 0
  %1005 = vmatpush1.bf16.msra.mxu0 %v920
  %1006 = vmatprep.subr.bf16.mxu0 0
  %1007 = vmatpush1.bf16.msra.mxu0 %v921
  %1008 = vmatprep.subr.bf16.mxu0 0
  %1009 = vmatpush1.bf16.msra.mxu0 %v922
  %1010 = vmatprep.subr.bf16.mxu0 0
  %1011 = vmatpush1.bf16.msra.mxu0 %v923
  %1012 = vmatprep.subr.bf16.mxu0 0
  %1013 = vmatpush1.bf16.msra.mxu0 0
  %1014 = vmatprep.subr.bf16.mxu0 0
  %1015 = vmatpush1.bf16.msra.mxu0 0
  %1016 = vmatprep.subr.bf16.mxu0 0
  %1017 = vmatpush1.bf16.msra.mxu0 0
  %1018 = vmatprep.subr.bf16.mxu0 0
  %1019 = vmatpush1.bf16.msra.mxu0 0
  %1020 = vmatprep.subr.bf16.mxu0 0
  %1021 = vmatpush1.bf16.msra.mxu0 0
  %1022 = vmatprep.subr.bf16.mxu0 0
  %1023 = vmatpush1.bf16.msra.mxu0 0
  %1024 = vmatprep.subr.bf16.mxu0 0
  %1025 = vmatpush1.bf16.msra.mxu0 0
  %1026 = vmatprep.subr.bf16.mxu0 0
  %1027 = vmatpush1.bf16.msra.mxu0 0
  %1028 = vmatprep.mubr.bf16.mxu0 0
  %1029 = vmatmul.mubr.bf16.gmra.mrb[0].mxu0 %v988
  %v1030 = vpop.f32.mrb[0].mxu0
  %v1031 = vadd.f32 %v935, %v1030
  %v1032 = vpop.f32.mrb[0].mxu0
  %v1033 = vpop.f32.mrb[0].mxu0
  %v1034 = vadd.f32 %v940, %v1033
  %v1035 = vpop.f32.mrb[0].mxu0
  %1036 = vmatprep.mubr.bf16.mxu0 0
  %1037 = vmatmul.mubr.bf16.gmra.mrb[0].mxu0 %v989
  %v1038 = vpop.f32.mrb[0].mxu0
  %v1039 = vadd.f32 %v945, %v1038
  %v1040 = vpop.f32.mrb[0].mxu0
  %v1041 = vpop.f32.mrb[0].mxu0
  %v1042 = vadd.f32 %v950, %v1041
  %v1043 = vpop.f32.mrb[0].mxu0
  %1044 = vmatprep.mubr.bf16.mxu0 0
  %1045 = vmatmul.mubr.bf16.gmra.mrb[0].mxu0 %v990
  %v1046 = vpop.f32.mrb[0].mxu0
  %v1047 = vadd.f32 %v955, %v1046
  %v1048 = vpop.f32.mrb[0].mxu0
  %v1049 = vpop.f32.mrb[0].mxu0
  %v1050 = vadd.f32 %v960, %v1049
  %v1051 = vpop.f32.mrb[0].mxu0
  %1052 = vmatprep.mubr.bf16.mxu0 0
  %1053 = vmatmul.mubr.bf16.gmra.mrb[0].mxu0 %v991
  %v1054 = vpop.f32.mrb[0].mxu0
  %v1055 = vadd.f32 %v965, %v1054
  %v1056 = vpop.f32.mrb[0].mxu0
  %v1057 = vpop.f32.mrb[0].mxu0
  %v1058 = vadd.f32 %v970, %v1057
  %v1059 = vpop.f32.mrb[0].mxu0
  %1060 = vdwg.mxu0
  %v1061 = vmax.f32 %v1031, 0.0
  %v1062 = vmax.f32 %v1034, 0.0
  %v1063 = vmax.f32 %v1039, 0.0
  %v1064 = vmax.f32 %v1042, 0.0
  %v1065 = vmax.f32 %v1047, 0.0
  %v1066 = vmax.f32 %v1050, 0.0
  %v1067 = vmax.f32 %v1055, 0.0
  %v1068 = vmax.f32 %v1058, 0.0
  %v1069 = vld [vmem:[%s7] sm:$0xff]
  %v1070 = vld [vmem:[%s7 + $0x8] sm:$0xff]
  %v1071 = vld [vmem:[%s7 + $0x10] sm:$0xff]
  %v1072 = vld [vmem:[%s7 + $0x18] sm:$0xff]
  %v1073 = vld [vmem:[%s7 + $0x20] sm:$0xff]
  %v1074 = vld [vmem:[%s7 + $0x28] sm:$0xff]
  %v1075 = vld [vmem:[%s7 + $0x30] sm:$0xff]
  %v1076 = vld [vmem:[%s7 + $0x38] sm:$0xff]
  %1078 = vset.pattern.permute.xlu0 0
  %1079 = vperm.xlu0 %1078, %v1069
  %v1080 = vpop.permute.xlu0 %1079
  %1083 = vset.pattern.permute.xlu0 0
  %1084 = vperm.xlu0 %1083, %v1070
  %v1085 = vpop.permute.xlu0 %1084
  %1088 = vset.pattern.permute.xlu0 0
  %1089 = vperm.xlu0 %1088, %v1071
  %v1090 = vpop.permute.xlu0 %1089
  %1093 = vset.pattern.permute.xlu0 0
  %1094 = vperm.xlu0 %1093, %v1072
  %v1095 = vpop.permute.xlu0 %1094
  %1098 = vset.pattern.permute.xlu0 0
  %1099 = vperm.xlu0 %1098, %v1073
  %v1100 = vpop.permute.xlu0 %1099
  %1103 = vset.pattern.permute.xlu0 0
  %1104 = vperm.xlu0 %1103, %v1074
  %v1105 = vpop.permute.xlu0 %1104
  %1108 = vset.pattern.permute.xlu0 0
  %1109 = vperm.xlu0 %1108, %v1075
  %v1110 = vpop.permute.xlu0 %1109
  %1113 = vset.pattern.permute.xlu0 0
  %1114 = vperm.xlu0 %1113, %v1076
  %v1115 = vpop.permute.xlu0 %1114
  %v1117 = vmul.f32 %v1061, %v1080
  %v1118 = vmul.f32 %v1062, %v1085
  %v1119 = vmul.f32 %v1063, %v1090
  %v1120 = vmul.f32 %v1064, %v1095
  %v1121 = vmul.f32 %v1065, %v1100
  %v1122 = vmul.f32 %v1066, %v1105
  %v1123 = vmul.f32 %v1067, %v1110
  %v1124 = vmul.f32 %v1068, %v1115
  %v1125 = vadd.f32 %v1117, %v1118
  %v1126 = vadd.f32 %v1125, %v1119
  %v1127 = vadd.f32 %v1126, %v1120
  %v1128 = vadd.f32 %v1127, %v1121
  %v1129 = vadd.f32 %v1128, %v1122
  %v1130 = vadd.f32 %v1129, %v1123
  %v1131 = vadd.f32 %v1130, %v1124
  %v1132 = vrot.slane %v1131, 4
  %v1133 = vadd.f32 %v1131, %v1132
  %v1134 = vrot.slane %v1133, 2
  %v1135 = vadd.f32 %v1133, %v1134
  %v1136 = vrot.slane %v1135, 1
  %v1137 = vadd.f32 %v1135, %v1136
  %v1138 = vld [vmem:[#allocation2] sm:$0x1]
  %1140 = vset.pattern.permute.xlu0 0
  %1141 = vperm.xlu0 %1140, %v1138
  %v1142 = vpop.permute.xlu0 %1141
  %v1144 = vlaneseq
  %v1145 = vshrl.u32 %v1144, 7
  %v1146 = vsub.s32 0, %v1145
  %v1147 = vrot.slane %v1142, %v1146
  %v1148 = vadd.f32 %v1137, %v1147
  %v1149 = vsub.f32 0.0, %v1148
  %v1150 = vmul.f32 %v1149, 1.442695
  %v1151 = vpow.pop %v1150
  %v1152 = vadd.f32 %v1151, 1.0
  %v1153 = vrcp.pop %v1152
  %1154 = vst [vmem:[%s9] sm:$0x1] %v1153
  // Predicated region
  $region38: #{discriminator_forward.1} parent=0 // pred_check
    _
  $region39: #{discriminator_forward.1} parent=0 // pred_check_branch
    %1156 = sbr.rel (0) target = $region41
  $region40: #{discriminator_forward.1} parent=0 // pred_region
    _
  $region41: #{discriminator_forward.1} parent=0 // pred_fallthru
    _
  // Predicated region
  $region42: #{discriminator_forward.1} parent=0 // pred_check
    _
  $region43: #{discriminator_forward.1} parent=0 // pred_check_branch
    %1158 = sbr.rel (0) target = $region45
  $region44: #{discriminator_forward.1} parent=0 // pred_region
    _
  $region45: #{discriminator_forward.1} parent=0 // pred_fallthru
    _

</llo_original>
